<compile_context>
chip_gen: v6e
topology: v6e:2x2x1
jax: 0.10.0
libtpu: 0.0.40
codegen_flags: <defaults>
</compile_context>

<pallas_src>
import functools
import math

import jax
import jax.numpy as jnp
from jax.experimental import pallas as pl
from jax.experimental.pallas import tpu as pltpu


def _rup(n, m):
    return -(-n // m) * m


def _tconv_kernel(x_ref, w_ref, b_ref, o_ref, xt_ref, *,
                  Kt, c_out, act_func, T_tile, V):
    # x_ref : (1, C_in, T_pad*V)    channel-major per-batch slab (free NCHW reshape)
    # w_ref : (Kt, C_in, C_out2)    causal-conv weights, Align folded into tap Kt-1
    # b_ref : (1, C_out2)           fused bias (f32)
    # o_ref : (1, c_out, T_tile*V)  channel-major, lane-dense output tile
    # xt_ref: (T_pad*V, C_in)       scratch: time-major slab, persists across the t axis
    rows = T_tile * V
    C_out2 = w_ref.shape[-1]

    # Build the time-major MXU operand once per batch (VMEM/XLU only — replaces the
    # previous wrapper-side HBM transpose).
    @pl.when(pl.program_id(1) == 0)
    def _():
        xt_ref[...] = x_ref[0].T.astype(xt_ref.dtype)

    t0 = pl.program_id(1) * T_tile
    g = math.gcd(V, 128)

    # Hoisted bias broadcast is the accumulator init; accumulate Kt taps in f32.
    acc = jnp.broadcast_to(b_ref[...].astype(jnp.float32), (rows, C_out2))
    for k in range(Kt):                        # Kt is a small static int -> unrolled
        start = (t0 + k) * V
        if g >= 8:
            start = pl.multiple_of(start, g)   # sublane-aligned window start
        xk = xt_ref[pl.ds(start, rows), :]     # (rows, C_in) in compute dtype
        acc = acc + jnp.dot(xk, w_ref[k], preferred_element_type=jnp.float32)

    if act_func == "glu":
        out = acc[:, :c_out] * jax.nn.sigmoid(acc[:, c_out:])
    elif act_func == "gtu":
        out = jnp.tanh(acc[:, :c_out]) * jax.nn.sigmoid(acc[:, c_out:])
    elif act_func == "relu":
        out = jnp.maximum(acc, 0.0)
    elif act_func == "silu":
        out = acc * jax.nn.sigmoid(acc)
    else:
        raise NotImplementedError(act_func)

    # (rows, c_out) -> (c_out, rows): cast first, then one in-VMEM transpose so the
    # store is lane-dense (rows is a multiple of 128 whenever num_t > 1).
    o_ref[0, :, :] = out.astype(o_ref.dtype).T


def _choose_t_tile(T_out, V, *, target_rows=1024, single_tile_rows=4096):
    """Output time steps computed per grid step.

    Guarantees T_tile*V % 128 == 0 (lane-dense output blocks) unless one tile covers
    the whole time axis, and prefers tiles that divide T_out exactly so the jnp.pad
    HBM copy is never needed in the common case.
    """
    if T_out * V <= single_tile_rows:
        return T_out                                  # single tile, no padding
    step = 128 // math.gcd(V, 128)                    # smallest t with t*V % 128 == 0
    t = _rup(max(1, -(-target_rows // V)), step)      # ~target_rows MXU rows per step
    t = min(t, _rup(T_out, step))
    best = None
    for cand in range(step, min(T_out, 4 * t) + 1, step):
        if T_out % cand == 0 and (best is None or abs(cand - t) < abs(best - t)):
            best = cand
    return best if best is not None else t


def temporal_conv_layer(x_nchw, w_conv, b_conv, w_align, b_align, *,
                        Kt, c_out, act_func, compute_dtype=jnp.bfloat16):
    """STGCN TemporalConvLayer forward.

    x_nchw : (B, C_in, T, V) float32
    w_conv : (Kt, C_in, C_out2) causal-conv weight (C_out2 = 2*c_out for glu/gtu)
    b_conv : (1, C_out2)
    w_align / b_align : effective (C_in, c_out) / (1, c_out) Align projection
                        (1x1 conv / channel zero-pad / identity, per the PyTorch Align)
    Returns (B, c_out, T - Kt + 1, V) in x_nchw.dtype.
    """
    B, C_in, T, V = x_nchw.shape
    C_out2 = w_conv.shape[-1]
    T_out = T - Kt + 1
    assert T_out >= 1

    # --- Fold the Align projection into the last conv tap (input time t+Kt-1); exact. ---
    if act_func in ("glu", "gtu"):
        assert C_out2 == 2 * c_out, (C_out2, c_out)
        w_fused = w_conv.at[Kt - 1, :, :c_out].add(w_align)
        b_fused = b_conv.at[:, :c_out].add(b_align)
    else:  # relu / silu
        assert C_out2 == c_out, (C_out2, c_out)
        w_fused = w_conv.at[Kt - 1].add(w_align)
        b_fused = b_conv + b_align
    w_fused = w_fused.astype(compute_dtype)
    b_fused = b_fused.astype(jnp.float32)

    # --- Vertex padding only when V is not sublane-aligned (e.g. V = 207/325). ---
    V_pad = _rup(V, 8) if V % 8 else V

    # --- Time tiling (prefers configurations that need no padding at all). ---
    T_tile = _choose_t_tile(T_out, V_pad)
    num_t = -(-T_out // T_tile)
    T_out_pad = num_t * T_tile
    T_pad = T_out_pad + Kt - 1
    rows = T_tile * V_pad

    if T_pad > T or V_pad > V:                 # fallback only; costs one HBM copy
        x_nchw = jnp.pad(x_nchw, ((0, 0), (0, 0), (0, T_pad - T), (0, V_pad - V)))

    # Free reshape: NCHW is already the channel-major operand — no HBM transpose.
    x_flat = x_nchw.reshape(B, C_in, T_pad * V_pad)

    kernel = functools.partial(_tconv_kernel, Kt=Kt, c_out=c_out,
                               act_func=act_func, T_tile=T_tile, V=V_pad)

    # --- Layout-padding-aware VMEM budget, capped by the actual chip's VMEM. ---
    cb = jnp.dtype(compute_dtype).itemsize
    sub = 8 * (4 // cb)                                          # 8 for f32, 16 for bf16
    x_bytes = 4 * _rup(C_in, 8) * _rup(T_pad * V_pad, 128)
    o_bytes = 4 * _rup(c_out, 8) * _rup(rows, 128)
    w_bytes = cb * Kt * _rup(C_in, sub) * _rup(C_out2, 128) + 4 * 8 * _rup(C_out2, 128)
    xt_bytes = cb * _rup(T_pad * V_pad, sub) * _rup(C_in, 128)
    tmp_bytes = 4 * 4 * _rup(rows, 8) * _rup(C_out2, 128)        # acc / act / out.T temps
    need = 2 * (x_bytes + o_bytes + w_bytes) + xt_bytes + tmp_bytes + (4 << 20)
    try:
        cap = min(int(pltpu.get_tpu_info().vmem_capacity_bytes) - (16 << 20), 100 << 20)
    except Exception:                                            # conservative fallback
        cap = 64 << 20
    vmem_limit = int(min(max(need, 16 << 20), max(cap, 32 << 20)))

    out_flat = pl.pallas_call(
        kernel,
        out_shape=jax.ShapeDtypeStruct((B, c_out, T_out_pad * V_pad), x_nchw.dtype),
        grid_spec=pltpu.PrefetchScalarGridSpec(
            num_scalar_prefetch=0,
            grid=(B, num_t),
            in_specs=[
                pl.BlockSpec((1, C_in, T_pad * V_pad), lambda b, t: (b, 0, 0)),
                pl.BlockSpec((Kt, C_in, C_out2), lambda b, t: (0, 0, 0)),
                pl.BlockSpec((1, C_out2), lambda b, t: (0, 0)),
            ],
            out_specs=pl.BlockSpec((1, c_out, rows), lambda b, t: (b, 0, t)),
            scratch_shapes=[pltpu.VMEM((T_pad * V_pad, C_in), compute_dtype)],
        ),
        compiler_params=pltpu.CompilerParams(
            # t must be sequential: the time-major scratch is built at t == 0 per batch.
            dimension_semantics=("parallel", "arbitrary"),
            vmem_limit_bytes=vmem_limit),
    )(x_flat, w_fused, b_fused)

    # Free reshape + slice back to NCHW: no output-side HBM transpose.
    return out_flat.reshape(B, c_out, T_out_pad, V_pad)[:, :, :T_out, :V]


def _reference(x_nchw, w_conv, b_conv, w_align, b_align, *, Kt, c_out, act_func):
    """Pure-JAX reference (mirrors the PyTorch forward, unfused parameters)."""
    x = jnp.transpose(x_nchw, (0, 2, 3, 1)).astype(jnp.float32)  # (B,T,V,C_in)
    B, T, V, C_in = x.shape
    T_out = T - Kt + 1
    conv = jnp.zeros((B, T_out, V, w_conv.shape[-1]), jnp.float32)
    for k in range(Kt):
        conv = conv + jnp.einsum("btvc,cd->btvd", x[:, k:k + T_out], w_conv[k])
    conv = conv + b_conv[0]
    x_in = jnp.einsum("btvc,cd->btvd", x[:, Kt - 1:], w_align) + b_align[0]
    if act_func == "glu":
        out = (conv[..., :c_out] + x_in) * jax.nn.sigmoid(conv[..., c_out:])
    elif act_func == "gtu":
        out = jnp.tanh(conv[..., :c_out] + x_in) * jax.nn.sigmoid(conv[..., c_out:])
    elif act_func == "relu":
        out = jnp.maximum(conv + x_in, 0.0)
    else:
        out = jax.nn.silu(conv + x_in)
    return jnp.transpose(out, (0, 3, 1, 2))


if __name__ == "__main__":
    # Small deterministic config (c_in < c_out exercises the zero-pad Align branch;
    # act_func='glu' exercises the gated path).
    B, C_in, T, V = 2, 4, 8, 16
    Kt, c_out = 3, 8
    act_func = "glu"
    C_out2 = 2 * c_out if act_func in ("glu", "gtu") else c_out

    key = jax.random.PRNGKey(0)
    kx, kw, kb = jax.random.split(key, 3)

    x = jax.random.normal(kx, (B, C_in, T, V), dtype=jnp.float32)

    # Causal conv params: PyTorch weight (C_out2, C_in, Kt, 1) -> (Kt, C_in, C_out2).
    w_conv = (jax.random.normal(kw, (Kt, C_in, C_out2), dtype=jnp.float32)
              * (1.0 / math.sqrt(C_in * Kt)))
    b_conv = jax.random.normal(kb, (1, C_out2), dtype=jnp.float32) * 0.01

    # Effective Align projection.
    if C_in < c_out:        # channel zero-pad == [I_{c_in} | 0], zero bias
        w_align = jnp.concatenate(
            [jnp.eye(C_in, dtype=jnp.float32),
             jnp.zeros((C_in, c_out - C_in), jnp.float32)], axis=1)
        b_align = jnp.zeros((1, c_out), jnp.float32)
    elif C_in == c_out:     # identity
        w_align = jnp.eye(C_in, dtype=jnp.float32)
        b_align = jnp.zeros((1, c_out), jnp.float32)
    else:                   # 1x1 conv
        ka1, ka2 = jax.random.split(jax.random.PRNGKey(1))
        w_align = (jax.random.normal(ka1, (C_in, c_out), jnp.float32)
                   * (1.0 / math.sqrt(C_in)))
        b_align = jax.random.normal(ka2, (1, c_out), jnp.float32) * 0.01

    ref = _reference(x, w_conv, b_conv, w_align, b_align,
                     Kt=Kt, c_out=c_out, act_func=act_func)

    # Exact path (f32 MXU operands): must match the f32 reference tightly.
    out_f32 = temporal_conv_layer(x, w_conv, b_conv, w_align, b_align,
                                  Kt=Kt, c_out=c_out, act_func=act_func,
                                  compute_dtype=jnp.float32)
    out_f32 = jax.block_until_ready(out_f32)
    assert out_f32.shape == (B, c_out, T - Kt + 1, V), out_f32.shape
    assert jnp.allclose(out_f32, ref, atol=1e-5, rtol=1e-5), "f32 mismatch vs reference"

    # Fast path (bf16 MXU operands, f32 accumulation): looser tolerance by design.
    out_bf16 = temporal_conv_layer(x, w_conv, b_conv, w_align, b_align,
                                   Kt=Kt, c_out=c_out, act_func=act_func,
                                   compute_dtype=jnp.bfloat16)
    out_bf16 = jax.block_until_ready(out_bf16)
    assert out_bf16.shape == (B, c_out, T - Kt + 1, V), out_bf16.shape
    assert jnp.allclose(out_bf16, ref, atol=3e-2, rtol=3e-2), "bf16 mismatch vs reference"

    print("KERNEL_OK")
</pallas_src>

<mosaic_0001>
module attributes {stable_mosaic.version = 11 : i64} {
  func.func @_tconv_kernel(%arg0: i32, %arg1: i32, %arg2: memref<1x4x128xf32, #tpu.memory_space<vmem>>, %arg3: memref<3x4x16xf32, #tpu.memory_space<vmem>>, %arg4: memref<1x16xf32, #tpu.memory_space<vmem>>, %arg5: memref<1x8x96xf32, #tpu.memory_space<vmem>>, %arg6: memref<128x4xf32, #tpu.memory_space<vmem>>) attributes {dimension_semantics = [#tpu.dimension_semantics<parallel>, #tpu.dimension_semantics<arbitrary>], iteration_bounds = array<i64: 2, 1>, scalar_prefetch = 0 : i64, scratch_operands = 1 : i64, tpu.core_type = #tpu.core_type<tc>, window_params = [{transform_indices = @transform_0, window_bounds = array<i64: 1, 4, 128>}, {pipeline_mode = #tpu.pipeline_mode<synchronous>, transform_indices = @transform_1, window_bounds = array<i64: 3, 4, 16>}, {pipeline_mode = #tpu.pipeline_mode<synchronous>, transform_indices = @transform_2, window_bounds = array<i64: 1, 16>}, {transform_indices = @transform_3, window_bounds = array<i64: 1, 8, 96>}]} {
    %c0_i32 = arith.constant 0 : i32
    %0 = arith.cmpi eq, %arg1, %c0_i32 : i32
    %1 = arith.extui %0 : i1 to i32
    %c0_i32_0 = arith.constant 0 : i32
    %2 = arith.cmpi ne, %1, %c0_i32_0 : i32
    scf.if %2 {
      %c0_21 = arith.constant 0 : index
      %c0_22 = arith.constant 0 : index
      %c0_23 = arith.constant 0 : index
      %46 = vector.load %arg2[%c0_21, %c0_22, %c0_23] : memref<1x4x128xf32, #tpu.memory_space<vmem>>, vector<1x4x128xf32>
      %47 = vector.shape_cast %46 : vector<1x4x128xf32> to vector<4x128xf32>
      %48 = tpu.transpose %47, [1, 0] : vector<4x128xf32> -> vector<128x4xf32>
      %c0_24 = arith.constant 0 : index
      %c0_25 = arith.constant 0 : index
      %49 = vector.load %arg6[%c0_24, %c0_25] : memref<128x4xf32, #tpu.memory_space<vmem>>, vector<128x4xf32>
      tpu.vector_store %arg6[%c0_24, %c0_25], %48 {strides = array<i32>} : memref<128x4xf32, #tpu.memory_space<vmem>>, vector<128x4xf32>,
    } else {
    }
    %c6_i32 = arith.constant 6 : i32
    %3 = arith.muli %arg1, %c6_i32 : i32
    %c0 = arith.constant 0 : index
    %c0_1 = arith.constant 0 : index
    %4 = vector.load %arg4[%c0, %c0_1] : memref<1x16xf32, #tpu.memory_space<vmem>>, vector<1x16xf32>
    %5 = vector.shape_cast %4 : vector<1x16xf32> to vector<1x16xf32>
    %6 = vector.broadcast %5 : vector<1x16xf32> to vector<96x16xf32>
    %c0_i32_2 = arith.constant 0 : i32
    %7 = arith.addi %3, %c0_i32_2 : i32
    %c16_i32 = arith.constant 16 : i32
    %8 = arith.muli %7, %c16_i32 : i32
    %9 = tpu.assume_multiple %8, 16 : i32
    %10 = arith.index_cast %9 : i32 to index
    %c0_3 = arith.constant 0 : index
    %11 = vector.load %arg6[%10, %c0_3] : memref<128x4xf32, #tpu.memory_space<vmem>>, vector<96x4xf32>
    %c0_4 = arith.constant 0 : index
    %c0_5 = arith.constant 0 : index
    %c0_6 = arith.constant 0 : index
    %12 = vector.load %arg3[%c0_4, %c0_5, %c0_6] : memref<3x4x16xf32, #tpu.memory_space<vmem>>, vector<1x4x16xf32>
    %13 = vector.shape_cast %12 : vector<1x4x16xf32> to vector<4x16xf32>
    %cst = arith.constant dense<0.000000e+00> : vector<96x16xf32>
    %14 = tpu.matmul %11, %13, %cst {dimension_numbers = #tpu.dot_dimension_numbers<[1], [0], [0], [1], [0, 0, 1, 1], [], []>} : vector<96x4xf32>, vector<4x16xf32>, vector<96x16xf32> -> vector<96x16xf32>
    %15 = arith.addf %6, %14 : vector<96x16xf32>
    %c1_i32 = arith.constant 1 : i32
    %16 = arith.addi %3, %c1_i32 : i32
    %c16_i32_7 = arith.constant 16 : i32
    %17 = arith.muli %16, %c16_i32_7 : i32
    %18 = tpu.assume_multiple %17, 16 : i32
    %19 = arith.index_cast %18 : i32 to index
    %c0_8 = arith.constant 0 : index
    %20 = vector.load %arg6[%19, %c0_8] : memref<128x4xf32, #tpu.memory_space<vmem>>, vector<96x4xf32>
    %c1 = arith.constant 1 : index
    %c0_9 = arith.constant 0 : index
    %c0_10 = arith.constant 0 : index
    %21 = vector.load %arg3[%c1, %c0_9, %c0_10] : memref<3x4x16xf32, #tpu.memory_space<vmem>>, vector<1x4x16xf32>
    %22 = vector.shape_cast %21 : vector<1x4x16xf32> to vector<4x16xf32>
    %cst_11 = arith.constant dense<0.000000e+00> : vector<96x16xf32>
    %23 = tpu.matmul %20, %22, %cst_11 {dimension_numbers = #tpu.dot_dimension_numbers<[1], [0], [0], [1], [0, 0, 1, 1], [], []>} : vector<96x4xf32>, vector<4x16xf32>, vector<96x16xf32> -> vector<96x16xf32>
    %24 = arith.addf %15, %23 : vector<96x16xf32>
    %c2_i32 = arith.constant 2 : i32
    %25 = arith.addi %3, %c2_i32 : i32
    %c16_i32_12 = arith.constant 16 : i32
    %26 = arith.muli %25, %c16_i32_12 : i32
    %27 = tpu.assume_multiple %26, 16 : i32
    %28 = arith.index_cast %27 : i32 to index
    %c0_13 = arith.constant 0 : index
    %29 = vector.load %arg6[%28, %c0_13] : memref<128x4xf32, #tpu.memory_space<vmem>>, vector<96x4xf32>
    %c2 = arith.constant 2 : index
    %c0_14 = arith.constant 0 : index
    %c0_15 = arith.constant 0 : index
    %30 = vector.load %arg3[%c2, %c0_14, %c0_15] : memref<3x4x16xf32, #tpu.memory_space<vmem>>, vector<1x4x16xf32>
    %31 = vector.shape_cast %30 : vector<1x4x16xf32> to vector<4x16xf32>
    %cst_16 = arith.constant dense<0.000000e+00> : vector<96x16xf32>
    %32 = tpu.matmul %29, %31, %cst_16 {dimension_numbers = #tpu.dot_dimension_numbers<[1], [0], [0], [1], [0, 0, 1, 1], [], []>} : vector<96x4xf32>, vector<4x16xf32>, vector<96x16xf32> -> vector<96x16xf32>
    %33 = arith.addf %24, %32 : vector<96x16xf32>
    %34 = vector.extract_strided_slice %33 {offsets = [0, 0], sizes = [96, 8], strides = [1, 1]} : vector<96x16xf32> to vector<96x8xf32>
    %35 = vector.extract_strided_slice %33 {offsets = [0, 8], sizes = [96, 8], strides = [1, 1]} : vector<96x16xf32> to vector<96x8xf32>
    %36 = arith.negf %35 : vector<96x8xf32>
    %37 = math.exp %36 : vector<96x8xf32>
    %cst_17 = arith.constant 1.000000e+00 : f32
    %38 = vector.broadcast %cst_17 : f32 to vector<96x8xf32>
    %39 = arith.addf %38, %37 : vector<96x8xf32>
    %40 = arith.divf %38, %39 : vector<96x8xf32>
    %41 = arith.mulf %34, %40 : vector<96x8xf32>
    %42 = tpu.transpose %41, [1, 0] : vector<96x8xf32> -> vector<8x96xf32>
    %c0_18 = arith.constant 0 : index
    %c0_19 = arith.constant 0 : index
    %c0_20 = arith.constant 0 : index
    %43 = vector.load %arg5[%c0_18, %c0_19, %c0_20] : memref<1x8x96xf32, #tpu.memory_space<vmem>>, vector<1x8x96xf32>
    %44 = vector.shape_cast %43 : vector<1x8x96xf32> to vector<8x96xf32>
    %45 = vector.shape_cast %42 : vector<8x96xf32> to vector<1x8x96xf32>
    tpu.vector_store %arg5[%c0_18, %c0_19, %c0_20], %45 {strides = array<i32>} : memref<1x8x96xf32, #tpu.memory_space<vmem>>, vector<1x8x96xf32>,
    return
  }
  func.func @transform_0(%arg0: i32, %arg1: i32) -> (i32, i32, i32) {
    %c0_i32 = arith.constant 0 : i32
    %c0_i32_0 = arith.constant 0 : i32
    %c0_i32_1 = arith.constant 0 : i32
    return %arg0, %c0_i32, %c0_i32_0 : i32, i32, i32
  }
  func.func @transform_1(%arg0: i32, %arg1: i32) -> (i32, i32, i32) {
    %c0_i32 = arith.constant 0 : i32
    %c0_i32_0 = arith.constant 0 : i32
    %c0_i32_1 = arith.constant 0 : i32
    %c0_i32_2 = arith.constant 0 : i32
    return %c0_i32, %c0_i32_0, %c0_i32_1 : i32, i32, i32
  }
  func.func @transform_2(%arg0: i32, %arg1: i32) -> (i32, i32) {
    %c0_i32 = arith.constant 0 : i32
    %c0_i32_0 = arith.constant 0 : i32
    %c0_i32_1 = arith.constant 0 : i32
    return %c0_i32, %c0_i32_0 : i32, i32
  }
  func.func @transform_3(%arg0: i32, %arg1: i32) -> (i32, i32, i32) {
    %c0_i32 = arith.constant 0 : i32
    %c0_i32_0 = arith.constant 0 : i32
    return %arg0, %c0_i32, %arg1 : i32, i32, i32
  }
}

</mosaic_0001>

<llo_original>
// kernel: tpu_custom_call.1
$region0: #{tpu_custom_call.1}
  #allocation0 [shape = 'u32[]', space=smem, size = 0x4, offset = 0x4, fixed_abs, tag = 'smem constant byte address 0x4 - core index']
  #allocation1 [shape = 'u32[144,128]{1,0:T(1,128)}', space=vmem, size = 0x12000, scoped, tag = 'internal scratch']
  #allocation2 [shape = 'f32[128,4]{1,0:T(8,128)}', space=vmem, size = 0x10000, scoped, tag = 'scratch operand']
  %s0 = inlined_call_operand.hbm [shape: f32[2,4,128], index: 0, kind: input, shape index: {}]
  %s1 = inlined_call_operand.hbm [shape: f32[3,4,16], index: 1, kind: input, shape index: {}]
  %s2 = inlined_call_operand.vmem [shape: f32[1,16], index: 2, kind: input, shape index: {}]
  %s3 = inlined_call_operand.hbm [shape: f32[2,8,96], index: 3, kind: output, shape index: {}]
  %s4 = sld [smem:[#allocation0]]
  $region57: #{tpu_custom_call.1} parent=0
    _
  %s6 = ssub.s32 1, %s4
  %s7 = scalar_select 0, %s6, %s4
  $region1: #{tpu_custom_call.1} parent=0
    #allocation3 [shape = 'u8[4096]{0}', space=vmem, size = 0x1000, scoped, tag = 'input window, operand 0']
    #allocation4 [shape = 's32[2]{0}', space=sflag, size = 0x8, scoped, tag = 'scoped memory for tpu_custom_call.1']
    #allocation5 [shape = 's32[2]{0}', space=sflag, size = 0x8, scoped, tag = 'scoped memory for tpu_custom_call.1']
    #allocation6 [shape = 'u8[6144]{0}', space=vmem, size = 0x1800, scoped, tag = 'input window, operand 1, single buffered']
    #allocation7 [shape = 's32[1]{0}', space=sflag, size = 0x4, scoped, tag = 'scoped memory for tpu_custom_call.1']
    #allocation8 [shape = 'u8[8192]{0}', space=vmem, size = 0x2000, scoped, tag = 'output window, operand 0']
    %8 = vsyncpa [#allocation4], 0
    %s9 = scalar_lea.sflag [#allocation4], 1
    %10 = vsyncpa %s9, 0
    %11 = vsyncpa [#allocation7], 0
    %12 = vsyncpa [#allocation5], 0
    %s13 = scalar_lea.sflag [#allocation5], 1
    %14 = vsyncpa %s13, 0
    loop: start=0, step=1, limit=4
    $region2: #{tpu_custom_call.1} parent=1 // loop_pre_header
      _
    $region3: #{tpu_custom_call.1} parent=1 // loop_header
      %s16 = sphi 0, %s20
      %p17 = scmp.ge.s32.totalorder %s16, 4
      %s23 = sphi 0, %s35
      %s24 = sphi 0, %s31
      %s25 = sphi 0, %s23
      %s26 = sphi 0, %s24
      %s27 = sphi 0, %s25
      %s28 = sphi 0, %s26
      %s38 = sphi 0, %s40
      %s41 = sphi 0, %s38
      %s42 = sphi 0, %s41
      %s58 = sphi 0, %s42
      %s62 = sphi 0, %s62
      %s64 = sphi 0, %s62
      %s65 = sphi 0, %s64
      %s79 = sphi 0, %s65
      %s83 = sphi 0, %s83
      %s85 = sphi 0, %s83
      %s86 = sphi 0, %s85
      %s100 = sphi 0, %s86
      %s108 = sphi 0, %s110
      %s111 = sphi 0, %s108
      %s112 = sphi 0, %s111
      %s128 = sphi 0, %s112
    $region4: #{tpu_custom_call.1} parent=1 // loop_header_branch
      %19 = sbr.rel (%p17) target = $region8
    $region5: #{tpu_custom_call.1} parent=1 // loop_body
      %s21 = ssub.s32 %s16, 1
      %s22 = ssub.s32 %s16, 2
      %s29 = sadd.s32 1, %s24
      %p30 = scmp.ge.s32.totalorder %s29, 1
      %s31 = scalar_select %p30, 0, %s29
      %s32 = sadd.s32 1, %s23
      %s33 = scalar_select %p30, %s32, %s23
      %p34 = scmp.ge.s32.totalorder %s33, 2
      %s35 = scalar_select %p34, 0, %s33
      %s36 = ssub.s32 %s23, %s35
      %p37 = scmp.eq.s32.totalorder %s36, 0
      %s39 = sadd.s32 %s38, 1
      %s40 = scalar_select %p37, %s38, %s39
      %p43 = pneg %p37
      %p44 = scmp.eq.s32.totalorder %s16, 1
      %p45 = por %p43, %p44
      %p46 = scmp.ne.s32.totalorder %s38, %s41
      %p47 = scmp.eq.s32.totalorder %s16, 0
      %p48 = por %p46, %p47
      %p49 = scmp.ne.s32.totalorder %s38, %s41
      %p50 = scmp.eq.s32.totalorder %s21, 1
      %p51 = por %p49, %p50
      %p52 = scmp.ne.s32.totalorder %s41, %s42
      %p53 = scmp.eq.s32.totalorder %s21, 0
      %p54 = por %p52, %p53
      %p55 = scmp.ne.s32.totalorder %s41, %s42
      %p56 = scmp.eq.s32.totalorder %s22, 1
      %p57 = por %p55, %p56
      %p59 = scmp.ne.s32.totalorder %s42, %s58
      %p60 = scmp.eq.s32.totalorder %s22, 0
      %p61 = por %p59, %p60
      %s63 = sadd.s32 %s62, 1
      %p66 = scmp.eq.s32.totalorder %s16, 1
      %p67 = scmp.ne.s32.totalorder %s62, %s64
      %p68 = scmp.eq.s32.totalorder %s16, 0
      %p69 = por %p67, %p68
      %p70 = scmp.ne.s32.totalorder %s62, %s64
      %p71 = scmp.eq.s32.totalorder %s21, 1
      %p72 = por %p70, %p71
      %p73 = scmp.ne.s32.totalorder %s64, %s65
      %p74 = scmp.eq.s32.totalorder %s21, 0
      %p75 = por %p73, %p74
      %p76 = scmp.ne.s32.totalorder %s64, %s65
      %p77 = scmp.eq.s32.totalorder %s22, 1
      %p78 = por %p76, %p77
      %p80 = scmp.ne.s32.totalorder %s65, %s79
      %p81 = scmp.eq.s32.totalorder %s22, 0
      %p82 = por %p80, %p81
      %s84 = sadd.s32 %s83, 1
      %p87 = scmp.eq.s32.totalorder %s16, 1
      %p88 = scmp.ne.s32.totalorder %s83, %s85
      %p89 = scmp.eq.s32.totalorder %s16, 0
      %p90 = por %p88, %p89
      %p91 = scmp.ne.s32.totalorder %s83, %s85
      %p92 = scmp.eq.s32.totalorder %s21, 1
      %p93 = por %p91, %p92
      %p94 = scmp.ne.s32.totalorder %s85, %s86
      %p95 = scmp.eq.s32.totalorder %s21, 0
      %p96 = por %p94, %p95
      %p97 = scmp.ne.s32.totalorder %s85, %s86
      %p98 = scmp.eq.s32.totalorder %s22, 1
      %p99 = por %p97, %p98
      %p101 = scmp.ne.s32.totalorder %s86, %s100
      %p102 = scmp.eq.s32.totalorder %s22, 0
      %p103 = por %p101, %p102
      %s104 = ssub.s32 %s23, %s35
      %s105 = ssub.s32 %s24, %s31
      %s106 = sor.u32 %s104, %s105
      %p107 = scmp.eq.s32.totalorder %s106, 0
      %s109 = sadd.s32 %s108, 1
      %s110 = scalar_select %p107, %s108, %s109
      %p113 = pneg %p107
      %p114 = scmp.eq.s32.totalorder %s16, 1
      %p115 = por %p113, %p114
      %p116 = scmp.ne.s32.totalorder %s108, %s111
      %p117 = scmp.eq.s32.totalorder %s16, 0
      %p118 = por %p116, %p117
      %p119 = scmp.ne.s32.totalorder %s108, %s111
      %p120 = scmp.eq.s32.totalorder %s21, 1
      %p121 = por %p119, %p120
      %p122 = scmp.ne.s32.totalorder %s111, %s112
      %p123 = scmp.eq.s32.totalorder %s21, 0
      %p124 = por %p122, %p123
      %p125 = scmp.ne.s32.totalorder %s111, %s112
      %p126 = scmp.eq.s32.totalorder %s22, 1
      %p127 = por %p125, %p126
      %p129 = scmp.ne.s32.totalorder %s112, %s128
      %p130 = scmp.eq.s32.totalorder %s22, 0
      %p131 = por %p129, %p130
      %p132 = scmp.le.s32.totalorder 1, %s16
      %p133 = scmp.lt.s32.totalorder %s16, 3
      %p134 = pnand %p132, %p133
      %p135 = pneg %p134
      // Predicated region
      $region9: #{tpu_custom_call.1} parent=5 // pred_check
        _
      $region10: #{tpu_custom_call.1} parent=5 // pred_check_branch
        %137 = sbr.rel (%p134) target = $region12
      $region11: #{tpu_custom_call.1} parent=5 // pred_region
        %s138 = ssub.s32 %s16, 1
        // Predicated region
        $region13: #{tpu_custom_call.1} parent=11 // pred_check
          %p139 = pneg %p75
        $region14: #{tpu_custom_call.1} parent=11 // pred_check_branch
          %141 = sbr.rel (%p139) target = $region16
        $region15: #{tpu_custom_call.1} parent=11 // pred_region
          %s143 = ssub.s32 192, 192
          %144 = vsyncadd [#allocation7], %s143
          %s145 = sshll.u32 [#allocation6], 4
          %s146 = int_to_ptr.vmem [resolvable:$true] %s145
          %151 = dma.hbm_to_vmem [thread:$0]  %s1, 192, %s146, [#allocation7], 64, 64, 4
        $region16: #{tpu_custom_call.1} parent=11 // pred_fallthru
          _
        // Predicated region
        $region17: #{tpu_custom_call.1} parent=11 // pred_check
          %p152 = pneg %p96
        $region18: #{tpu_custom_call.1} parent=11 // pred_check_branch
          %154 = sbr.rel (%p152) target = $region20
        $region19: #{tpu_custom_call.1} parent=11 // pred_region
          _
        $region20: #{tpu_custom_call.1} parent=11 // pred_fallthru
          _
      $region12: #{tpu_custom_call.1} parent=5 // pred_fallthru
        _
      %p155 = scmp.lt.s32.totalorder %s16, 2
      // Predicated region
      $region21: #{tpu_custom_call.1} parent=5 // pred_check
        %p156 = pneg %p155
      $region22: #{tpu_custom_call.1} parent=5 // pred_check_branch
        %158 = sbr.rel (%p156) target = $region24
      $region23: #{tpu_custom_call.1} parent=5 // pred_region
        // Predicated region
        $region25: #{tpu_custom_call.1} parent=23 // pred_check
          %p159 = pneg %p48
        $region26: #{tpu_custom_call.1} parent=23 // pred_check_branch
          %161 = sbr.rel (%p159) target = $region28
        $region27: #{tpu_custom_call.1} parent=23 // pred_region
          %s162 = sand.u32 %s38, 1
          %s163 = scalar_lea.sflag [#allocation4], %s162
          %s164 = sand.u32 %s38, 1
          %s165 = smul.addr %s164, 4
          %s166 = scalar_lea.vmem [#allocation3], %s165
          %s168 = ssub.s32 64, 64
          %169 = vsyncadd %s163, %s168
          %s170 = smul.addr %s23, 64
          %s171 = scalar_lea.hbm %s0, %s170
          %s173 = sshll.u32 %s166, 4
          %s174 = int_to_ptr.vmem [resolvable:$true] %s173
          %176 = dma.hbm_to_vmem [thread:$0]  %s171, 64, %s174, %s163
        $region28: #{tpu_custom_call.1} parent=23 // pred_fallthru
          _
      $region24: #{tpu_custom_call.1} parent=5 // pred_fallthru
        _
      %p177 = scmp.le.s32.totalorder 1, %s16
      %p178 = scmp.lt.s32.totalorder %s16, 3
      %p179 = pnand %p177, %p178
      %p180 = pneg %p179
      // Predicated region
      $region29: #{tpu_custom_call.1} parent=5 // pred_check
        _
      $region30: #{tpu_custom_call.1} parent=5 // pred_check_branch
        %182 = sbr.rel (%p179) target = $region32
      $region31: #{tpu_custom_call.1} parent=5 // pred_region
        %s183 = ssub.s32 %s16, 1
        %s184 = sand.u32 %s41, 1
        %s185 = scalar_lea.sflag [#allocation4], %s184
        %s186 = sand.u32 %s41, 1
        %s187 = smul.addr %s186, 4
        %s188 = scalar_lea.vmem [#allocation3], %s187
        // Predicated region
        $region33: #{tpu_custom_call.1} parent=31 // pred_check
          %p189 = pneg %p54
        $region34: #{tpu_custom_call.1} parent=31 // pred_check_branch
          %191 = sbr.rel (%p189) target = $region36
        $region35: #{tpu_custom_call.1} parent=31 // pred_region
          %192 = dma.done %s185, 64
        $region36: #{tpu_custom_call.1} parent=31 // pred_fallthru
          _
        // Predicated region
        $region37: #{tpu_custom_call.1} parent=31 // pred_check
          %p193 = pneg %p75
        $region38: #{tpu_custom_call.1} parent=31 // pred_check_branch
          %195 = sbr.rel (%p193) target = $region40
        $region39: #{tpu_custom_call.1} parent=31 // pred_region
          %196 = dma.done [#allocation7], 192
        $region40: #{tpu_custom_call.1} parent=31 // pred_fallthru
          _
        %s197 = sand.u32 %s41, 1
        %s198 = scalar_lea.sflag [#allocation4], %s197
        %s199 = sand.u32 %s41, 1
        %s200 = smul.addr %s199, 4
        %s201 = scalar_lea.vmem [#allocation3], %s200
        %p202 = pneg %p54
        %p203 = pneg %p51
        %p204 = pneg %p75
        %p205 = pneg %p72
        %p206 = pneg %p96
        %p207 = pneg %p93
        %p208 = pneg %p124
        %p209 = pneg %p121
        %s210 = sand.u32 %s111, 1
        %s211 = scalar_lea.sflag [#allocation5], %s210
        %s212 = sand.u32 %s111, 1
        %s213 = smul.addr %s212, 8
        %s214 = scalar_lea.vmem [#allocation8], %s213
        %p215 = scmp.eq.s32.totalorder %s26, 0
        // Predicated region
        $region41: #{tpu_custom_call.1} parent=31 // pred_check
          %p216 = pneg %p215
        $region42: #{tpu_custom_call.1} parent=31 // pred_check_branch
          %218 = sbr.rel (%p216) target = $region44
        $region43: #{tpu_custom_call.1} parent=31 // pred_region
          %v219 = vld [vmem:[%s188] sm:$0xf]
          %220 = vxpose.xlu0.b32.start [1/16] %v219, 128
          %221 = vxpose.xlu0.b32.cont [2/16] 0.0, 128
          %222 = vxpose.xlu0.b32.cont [3/16] 0.0, 128
          %223 = vxpose.xlu0.b32.cont [4/16] 0.0, 128
          %224 = vxpose.xlu0.b32.cont [5/16] 0.0, 128
          %225 = vxpose.xlu0.b32.cont [6/16] 0.0, 128
          %226 = vxpose.xlu0.b32.cont [7/16] 0.0, 128
          %227 = vxpose.xlu0.b32.cont [8/16] 0.0, 128
          %228 = vxpose.xlu0.b32.cont [9/16] 0.0, 128
          %229 = vxpose.xlu0.b32.cont [10/16] 0.0, 128
          %230 = vxpose.xlu0.b32.cont [11/16] 0.0, 128
          %231 = vxpose.xlu0.b32.cont [12/16] 0.0, 128
          %232 = vxpose.xlu0.b32.cont [13/16] 0.0, 128
          %233 = vxpose.xlu0.b32.cont [14/16] 0.0, 128
          %234 = vxpose.xlu0.b32.cont [15/16] 0.0, 128
          %235 = vxpose.xlu0.b32.end [16/16] 0.0, 128
          %v236 = vpop.trf.xlu0
          %v237 = vpop.trf.xlu0
          %v238 = vpop.trf.xlu0
          %v239 = vpop.trf.xlu0
          %v240 = vpop.trf.xlu0
          %v241 = vpop.trf.xlu0
          %v242 = vpop.trf.xlu0
          %v243 = vpop.trf.xlu0
          %v244 = vpop.trf.xlu0
          %v245 = vpop.trf.xlu0
          %v246 = vpop.trf.xlu0
          %v247 = vpop.trf.xlu0
          %v248 = vpop.trf.xlu0
          %v249 = vpop.trf.xlu0
          %v250 = vpop.trf.xlu0
          %v251 = vpop.trf.xlu0
          %vm252 = vcmask 31744
          %253 = vst.msk [vmem:[#allocation2] sm:$0xff] %vm252, %v236
          %254 = vst.msk [vmem:[#allocation2 + $0x8] sm:$0xff] %vm252, %v237
          %255 = vst.msk [vmem:[#allocation2 + $0x10] sm:$0xff] %vm252, %v238
          %256 = vst.msk [vmem:[#allocation2 + $0x18] sm:$0xff] %vm252, %v239
          %257 = vst.msk [vmem:[#allocation2 + $0x20] sm:$0xff] %vm252, %v240
          %258 = vst.msk [vmem:[#allocation2 + $0x28] sm:$0xff] %vm252, %v241
          %259 = vst.msk [vmem:[#allocation2 + $0x30] sm:$0xff] %vm252, %v242
          %260 = vst.msk [vmem:[#allocation2 + $0x38] sm:$0xff] %vm252, %v243
          %261 = vst.msk [vmem:[#allocation2 + $0x40] sm:$0xff] %vm252, %v244
          %262 = vst.msk [vmem:[#allocation2 + $0x48] sm:$0xff] %vm252, %v245
          %263 = vst.msk [vmem:[#allocation2 + $0x50] sm:$0xff] %vm252, %v246
          %264 = vst.msk [vmem:[#allocation2 + $0x58] sm:$0xff] %vm252, %v247
          %265 = vst.msk [vmem:[#allocation2 + $0x60] sm:$0xff] %vm252, %v248
          %266 = vst.msk [vmem:[#allocation2 + $0x68] sm:$0xff] %vm252, %v249
          %267 = vst.msk [vmem:[#allocation2 + $0x70] sm:$0xff] %vm252, %v250
          %268 = vst.msk [vmem:[#allocation2 + $0x78] sm:$0xff] %vm252, %v251
        $region44: #{tpu_custom_call.1} parent=31 // pred_fallthru
          _
        %s269 = smul.u32 %s26, 6
        %v270 = vld [vmem:[%s2] sm:$0x1]
        %v272 = vlaneseq
        %v273 = vshrl.u32 %v272, 7
        %v274 = vsub.s32 0, %v273
        %v275 = vrot.slane %v270, %v274
        %s277 = smul.u32 %s26, 96
        %s278 = scalar_lea.vmem [#allocation2], %s277
        %v279 = vld [vmem:[%s278] sm:$0xff]
        %v280 = vld [vmem:[%s278 + $0x8] sm:$0xff]
        %v281 = vld [vmem:[%s278 + $0x10] sm:$0xff]
        %v282 = vld [vmem:[%s278 + $0x18] sm:$0xff]
        %v283 = vld [vmem:[%s278 + $0x20] sm:$0xff]
        %v284 = vld [vmem:[%s278 + $0x28] sm:$0xff]
        %v285 = vld [vmem:[%s278 + $0x30] sm:$0xff]
        %v286 = vld [vmem:[%s278 + $0x38] sm:$0xff]
        %v287 = vld [vmem:[%s278 + $0x40] sm:$0xff]
        %v288 = vld [vmem:[%s278 + $0x48] sm:$0xff]
        %v289 = vld [vmem:[%s278 + $0x50] sm:$0xff]
        %v290 = vld [vmem:[%s278 + $0x58] sm:$0xff]
        %v291 = vld [vmem:[#allocation6] sm:$0xf]
        %vm292 = vcmask 31744
        %v294 = vsel %vm292, %v279, 0
        %v297 = vsel %vm292, %v280, 0
        %v300 = vsel %vm292, %v281, 0
        %v303 = vsel %vm292, %v282, 0
        %v306 = vsel %vm292, %v283, 0
        %v309 = vsel %vm292, %v284, 0
        %v312 = vsel %vm292, %v285, 0
        %v315 = vsel %vm292, %v286, 0
        %v318 = vsel %vm292, %v287, 0
        %v321 = vsel %vm292, %v288, 0
        %v324 = vsel %vm292, %v289, 0
        %v327 = vsel %vm292, %v290, 0
        %vm329 = vcmask 1043456
        %v331 = vsel %vm329, %v291, 0
        %333 = vmatprep.subr.mxu0 0.0
        %334 = vmatpush1.msra.mxu0 0.0
        %335 = vmatprep.subr.mxu0 0.0
        %336 = vmatpush1.msra.mxu0 0.0
        %337 = vmatprep.subr.mxu0 0.0
        %338 = vmatpush1.msra.mxu0 0.0
        %339 = vmatprep.subr.mxu0 0.0
        %340 = vmatpush1.msra.mxu0 0.0
        %341 = vmatprep.subr.mxu0 0.0
        %342 = vmatpush1.msra.mxu0 0.0
        %343 = vmatprep.subr.mxu0 0.0
        %344 = vmatpush1.msra.mxu0 0.0
        %345 = vmatprep.subr.mxu0 0.0
        %346 = vmatpush1.msra.mxu0 0.0
        %347 = vmatprep.subr.mxu0 0.0
        %348 = vmatpush1.msra.mxu0 0.0
        %349 = vmatprep.subr.mxu0 0.0
        %350 = vmatpush1.msra.mxu0 0.0
        %351 = vmatprep.subr.mxu0 0.0
        %352 = vmatpush1.msra.mxu0 0.0
        %353 = vmatprep.subr.mxu0 0.0
        %354 = vmatpush1.msra.mxu0 0.0
        %355 = vmatprep.subr.mxu0 0.0
        %356 = vmatpush1.msra.mxu0 0.0
        %357 = vmatprep.subr.mxu0 0.0
        %358 = vmatpush1.msra.mxu0 0.0
        %359 = vmatprep.subr.mxu0 0.0
        %360 = vmatpush1.msra.mxu0 0.0
        %361 = vmatprep.subr.mxu0 0.0
        %362 = vmatpush1.msra.mxu0 0.0
        %363 = vmatprep.subr.mxu0 0.0
        %364 = vmatpush1.msra.mxu0 %v331
        %365 = vmatprep.subr.mxu0 0.0
        %366 = vmatpush2.msra.mxu0 0.0
        %367 = vmatprep.subr.mxu0 0.0
        %368 = vmatpush2.msra.mxu0 0.0
        %369 = vmatprep.subr.mxu0 0.0
        %370 = vmatpush2.msra.mxu0 0.0
        %371 = vmatprep.subr.mxu0 0.0
        %372 = vmatpush2.msra.mxu0 0.0
        %373 = vmatprep.subr.mxu0 0.0
        %374 = vmatpush2.msra.mxu0 0.0
        %375 = vmatprep.subr.mxu0 0.0
        %376 = vmatpush2.msra.mxu0 0.0
        %377 = vmatprep.subr.mxu0 0.0
        %378 = vmatpush2.msra.mxu0 0.0
        %379 = vmatprep.subr.mxu0 0.0
        %380 = vmatpush2.msra.mxu0 0.0
        %381 = vmatprep.subr.mxu0 0.0
        %382 = vmatpush2.msra.mxu0 0.0
        %383 = vmatprep.subr.mxu0 0.0
        %384 = vmatpush2.msra.mxu0 0.0
        %385 = vmatprep.subr.mxu0 0.0
        %386 = vmatpush2.msra.mxu0 0.0
        %387 = vmatprep.subr.mxu0 0.0
        %388 = vmatpush2.msra.mxu0 0.0
        %389 = vmatprep.subr.mxu0 0.0
        %390 = vmatpush2.msra.mxu0 0.0
        %391 = vmatprep.subr.mxu0 0.0
        %392 = vmatpush2.msra.mxu0 0.0
        %393 = vmatprep.subr.mxu0 0.0
        %394 = vmatpush2.msra.mxu0 0.0
        %395 = vmatprep.subr.mxu0 0.0
        %396 = vmatpush2.msra.mxu0 0.0
        %397 = vmatprep.mubr.f32.mxu0 0.0
        %398 = vmatmul.mubr.f32.gmra.mxu0 %v294
        %v399 = vpop.f32.mrf.mxu0
        %v400 = vadd.f32 0.0, %v399
        %v401 = vpop.f32.mrf.mxu0
        %402 = vmatprep.mubr.f32.mxu0 0.0
        %403 = vmatmul.mubr.f32.gmra.mxu0 %v297
        %v404 = vpop.f32.mrf.mxu0
        %v405 = vadd.f32 0.0, %v404
        %v406 = vpop.f32.mrf.mxu0
        %407 = vmatprep.mubr.f32.mxu0 0.0
        %408 = vmatmul.mubr.f32.gmra.mxu0 %v300
        %v409 = vpop.f32.mrf.mxu0
        %v410 = vadd.f32 0.0, %v409
        %v411 = vpop.f32.mrf.mxu0
        %412 = vmatprep.mubr.f32.mxu0 0.0
        %413 = vmatmul.mubr.f32.gmra.mxu0 %v303
        %v414 = vpop.f32.mrf.mxu0
        %v415 = vadd.f32 0.0, %v414
        %v416 = vpop.f32.mrf.mxu0
        %417 = vmatprep.mubr.f32.mxu0 0.0
        %418 = vmatmul.mubr.f32.gmra.mxu0 %v306
        %v419 = vpop.f32.mrf.mxu0
        %v420 = vadd.f32 0.0, %v419
        %v421 = vpop.f32.mrf.mxu0
        %422 = vmatprep.mubr.f32.mxu0 0.0
        %423 = vmatmul.mubr.f32.gmra.mxu0 %v309
        %v424 = vpop.f32.mrf.mxu0
        %v425 = vadd.f32 0.0, %v424
        %v426 = vpop.f32.mrf.mxu0
        %427 = vmatprep.mubr.f32.mxu0 0.0
        %428 = vmatmul.mubr.f32.gmra.mxu0 %v312
        %v429 = vpop.f32.mrf.mxu0
        %v430 = vadd.f32 0.0, %v429
        %v431 = vpop.f32.mrf.mxu0
        %432 = vmatprep.mubr.f32.mxu0 0.0
        %433 = vmatmul.mubr.f32.gmra.mxu0 %v315
        %v434 = vpop.f32.mrf.mxu0
        %v435 = vadd.f32 0.0, %v434
        %v436 = vpop.f32.mrf.mxu0
        %437 = vmatprep.mubr.f32.mxu0 0.0
        %438 = vmatmul.mubr.f32.gmra.mxu0 %v318
        %v439 = vpop.f32.mrf.mxu0
        %v440 = vadd.f32 0.0, %v439
        %v441 = vpop.f32.mrf.mxu0
        %442 = vmatprep.mubr.f32.mxu0 0.0
        %443 = vmatmul.mubr.f32.gmra.mxu0 %v321
        %v444 = vpop.f32.mrf.mxu0
        %v445 = vadd.f32 0.0, %v444
        %v446 = vpop.f32.mrf.mxu0
        %447 = vmatprep.mubr.f32.mxu0 0.0
        %448 = vmatmul.mubr.f32.gmra.mxu0 %v324
        %v449 = vpop.f32.mrf.mxu0
        %v450 = vadd.f32 0.0, %v449
        %v451 = vpop.f32.mrf.mxu0
        %452 = vmatprep.mubr.f32.mxu0 0.0
        %453 = vmatmul.mubr.f32.gmra.mxu0 %v327
        %v454 = vpop.f32.mrf.mxu0
        %v455 = vadd.f32 0.0, %v454
        %v456 = vpop.f32.mrf.mxu0
        %457 = vdwg.mxu0
        %v458 = vadd.f32 %v275, %v400
        %v459 = vadd.f32 %v275, %v405
        %v460 = vadd.f32 %v275, %v410
        %v461 = vadd.f32 %v275, %v415
        %v462 = vadd.f32 %v275, %v420
        %v463 = vadd.f32 %v275, %v425
        %v464 = vadd.f32 %v275, %v430
        %v465 = vadd.f32 %v275, %v435
        %v466 = vadd.f32 %v275, %v440
        %v467 = vadd.f32 %v275, %v445
        %v468 = vadd.f32 %v275, %v450
        %v469 = vadd.f32 %v275, %v455
        %s470 = sadd.s32 %s269, 1
        %s471 = smul.u32 %s470, 16
        %s472 = scalar_lea.vmem [#allocation2], %s471
        %v473 = vld [vmem:[%s472] sm:$0xff]
        %v474 = vld [vmem:[%s472 + $0x8] sm:$0xff]
        %v475 = vld [vmem:[%s472 + $0x10] sm:$0xff]
        %v476 = vld [vmem:[%s472 + $0x18] sm:$0xff]
        %v477 = vld [vmem:[%s472 + $0x20] sm:$0xff]
        %v478 = vld [vmem:[%s472 + $0x28] sm:$0xff]
        %v479 = vld [vmem:[%s472 + $0x30] sm:$0xff]
        %v480 = vld [vmem:[%s472 + $0x38] sm:$0xff]
        %v481 = vld [vmem:[%s472 + $0x40] sm:$0xff]
        %v482 = vld [vmem:[%s472 + $0x48] sm:$0xff]
        %v483 = vld [vmem:[%s472 + $0x50] sm:$0xff]
        %v484 = vld [vmem:[%s472 + $0x58] sm:$0xff]
        %s485 = scalar_lea.vmem [#allocation6], 4
        %v486 = vld [vmem:[%s485] sm:$0xf]
        %v488 = vsel %vm292, %v473, 0
        %v491 = vsel %vm292, %v474, 0
        %v494 = vsel %vm292, %v475, 0
        %v497 = vsel %vm292, %v476, 0
        %v500 = vsel %vm292, %v477, 0
        %v503 = vsel %vm292, %v478, 0
        %v506 = vsel %vm292, %v479, 0
        %v509 = vsel %vm292, %v480, 0
        %v512 = vsel %vm292, %v481, 0
        %v515 = vsel %vm292, %v482, 0
        %v518 = vsel %vm292, %v483, 0
        %v521 = vsel %vm292, %v484, 0
        %v524 = vsel %vm329, %v486, 0
        %526 = vmatprep.subr.mxu0 0.0
        %527 = vmatpush1.msra.mxu0 0.0
        %528 = vmatprep.subr.mxu0 0.0
        %529 = vmatpush1.msra.mxu0 0.0
        %530 = vmatprep.subr.mxu0 0.0
        %531 = vmatpush1.msra.mxu0 0.0
        %532 = vmatprep.subr.mxu0 0.0
        %533 = vmatpush1.msra.mxu0 0.0
        %534 = vmatprep.subr.mxu0 0.0
        %535 = vmatpush1.msra.mxu0 0.0
        %536 = vmatprep.subr.mxu0 0.0
        %537 = vmatpush1.msra.mxu0 0.0
        %538 = vmatprep.subr.mxu0 0.0
        %539 = vmatpush1.msra.mxu0 0.0
        %540 = vmatprep.subr.mxu0 0.0
        %541 = vmatpush1.msra.mxu0 0.0
        %542 = vmatprep.subr.mxu0 0.0
        %543 = vmatpush1.msra.mxu0 0.0
        %544 = vmatprep.subr.mxu0 0.0
        %545 = vmatpush1.msra.mxu0 0.0
        %546 = vmatprep.subr.mxu0 0.0
        %547 = vmatpush1.msra.mxu0 0.0
        %548 = vmatprep.subr.mxu0 0.0
        %549 = vmatpush1.msra.mxu0 0.0
        %550 = vmatprep.subr.mxu0 0.0
        %551 = vmatpush1.msra.mxu0 0.0
        %552 = vmatprep.subr.mxu0 0.0
        %553 = vmatpush1.msra.mxu0 0.0
        %554 = vmatprep.subr.mxu0 0.0
        %555 = vmatpush1.msra.mxu0 0.0
        %556 = vmatprep.subr.mxu0 0.0
        %557 = vmatpush1.msra.mxu0 %v524
        %558 = vmatprep.subr.mxu0 0.0
        %559 = vmatpush2.msra.mxu0 0.0
        %560 = vmatprep.subr.mxu0 0.0
        %561 = vmatpush2.msra.mxu0 0.0
        %562 = vmatprep.subr.mxu0 0.0
        %563 = vmatpush2.msra.mxu0 0.0
        %564 = vmatprep.subr.mxu0 0.0
        %565 = vmatpush2.msra.mxu0 0.0
        %566 = vmatprep.subr.mxu0 0.0
        %567 = vmatpush2.msra.mxu0 0.0
        %568 = vmatprep.subr.mxu0 0.0
        %569 = vmatpush2.msra.mxu0 0.0
        %570 = vmatprep.subr.mxu0 0.0
        %571 = vmatpush2.msra.mxu0 0.0
        %572 = vmatprep.subr.mxu0 0.0
        %573 = vmatpush2.msra.mxu0 0.0
        %574 = vmatprep.subr.mxu0 0.0
        %575 = vmatpush2.msra.mxu0 0.0
        %576 = vmatprep.subr.mxu0 0.0
        %577 = vmatpush2.msra.mxu0 0.0
        %578 = vmatprep.subr.mxu0 0.0
        %579 = vmatpush2.msra.mxu0 0.0
        %580 = vmatprep.subr.mxu0 0.0
        %581 = vmatpush2.msra.mxu0 0.0
        %582 = vmatprep.subr.mxu0 0.0
        %583 = vmatpush2.msra.mxu0 0.0
        %584 = vmatprep.subr.mxu0 0.0
        %585 = vmatpush2.msra.mxu0 0.0
        %586 = vmatprep.subr.mxu0 0.0
        %587 = vmatpush2.msra.mxu0 0.0
        %588 = vmatprep.subr.mxu0 0.0
        %589 = vmatpush2.msra.mxu0 0.0
        %590 = vmatprep.mubr.f32.mxu0 0.0
        %591 = vmatmul.mubr.f32.gmra.mxu0 %v488
        %v592 = vpop.f32.mrf.mxu0
        %v593 = vadd.f32 0.0, %v592
        %v594 = vpop.f32.mrf.mxu0
        %595 = vmatprep.mubr.f32.mxu0 0.0
        %596 = vmatmul.mubr.f32.gmra.mxu0 %v491
        %v597 = vpop.f32.mrf.mxu0
        %v598 = vadd.f32 0.0, %v597
        %v599 = vpop.f32.mrf.mxu0
        %600 = vmatprep.mubr.f32.mxu0 0.0
        %601 = vmatmul.mubr.f32.gmra.mxu0 %v494
        %v602 = vpop.f32.mrf.mxu0
        %v603 = vadd.f32 0.0, %v602
        %v604 = vpop.f32.mrf.mxu0
        %605 = vmatprep.mubr.f32.mxu0 0.0
        %606 = vmatmul.mubr.f32.gmra.mxu0 %v497
        %v607 = vpop.f32.mrf.mxu0
        %v608 = vadd.f32 0.0, %v607
        %v609 = vpop.f32.mrf.mxu0
        %610 = vmatprep.mubr.f32.mxu0 0.0
        %611 = vmatmul.mubr.f32.gmra.mxu0 %v500
        %v612 = vpop.f32.mrf.mxu0
        %v613 = vadd.f32 0.0, %v612
        %v614 = vpop.f32.mrf.mxu0
        %615 = vmatprep.mubr.f32.mxu0 0.0
        %616 = vmatmul.mubr.f32.gmra.mxu0 %v503
        %v617 = vpop.f32.mrf.mxu0
        %v618 = vadd.f32 0.0, %v617
        %v619 = vpop.f32.mrf.mxu0
        %620 = vmatprep.mubr.f32.mxu0 0.0
        %621 = vmatmul.mubr.f32.gmra.mxu0 %v506
        %v622 = vpop.f32.mrf.mxu0
        %v623 = vadd.f32 0.0, %v622
        %v624 = vpop.f32.mrf.mxu0
        %625 = vmatprep.mubr.f32.mxu0 0.0
        %626 = vmatmul.mubr.f32.gmra.mxu0 %v509
        %v627 = vpop.f32.mrf.mxu0
        %v628 = vadd.f32 0.0, %v627
        %v629 = vpop.f32.mrf.mxu0
        %630 = vmatprep.mubr.f32.mxu0 0.0
        %631 = vmatmul.mubr.f32.gmra.mxu0 %v512
        %v632 = vpop.f32.mrf.mxu0
        %v633 = vadd.f32 0.0, %v632
        %v634 = vpop.f32.mrf.mxu0
        %635 = vmatprep.mubr.f32.mxu0 0.0
        %636 = vmatmul.mubr.f32.gmra.mxu0 %v515
        %v637 = vpop.f32.mrf.mxu0
        %v638 = vadd.f32 0.0, %v637
        %v639 = vpop.f32.mrf.mxu0
        %640 = vmatprep.mubr.f32.mxu0 0.0
        %641 = vmatmul.mubr.f32.gmra.mxu0 %v518
        %v642 = vpop.f32.mrf.mxu0
        %v643 = vadd.f32 0.0, %v642
        %v644 = vpop.f32.mrf.mxu0
        %645 = vmatprep.mubr.f32.mxu0 0.0
        %646 = vmatmul.mubr.f32.gmra.mxu0 %v521
        %v647 = vpop.f32.mrf.mxu0
        %v648 = vadd.f32 0.0, %v647
        %v649 = vpop.f32.mrf.mxu0
        %650 = vdwg.mxu0
        %v651 = vadd.f32 %v458, %v593
        %v652 = vadd.f32 %v459, %v598
        %v653 = vadd.f32 %v460, %v603
        %v654 = vadd.f32 %v461, %v608
        %v655 = vadd.f32 %v462, %v613
        %v656 = vadd.f32 %v463, %v618
        %v657 = vadd.f32 %v464, %v623
        %v658 = vadd.f32 %v465, %v628
        %v659 = vadd.f32 %v466, %v633
        %v660 = vadd.f32 %v467, %v638
        %v661 = vadd.f32 %v468, %v643
        %v662 = vadd.f32 %v469, %v648
        %s663 = sadd.s32 %s269, 2
        %s664 = smul.u32 %s663, 16
        %s665 = scalar_lea.vmem [#allocation2], %s664
        %v666 = vld [vmem:[%s665] sm:$0xff]
        %v667 = vld [vmem:[%s665 + $0x8] sm:$0xff]
        %v668 = vld [vmem:[%s665 + $0x10] sm:$0xff]
        %v669 = vld [vmem:[%s665 + $0x18] sm:$0xff]
        %v670 = vld [vmem:[%s665 + $0x20] sm:$0xff]
        %v671 = vld [vmem:[%s665 + $0x28] sm:$0xff]
        %v672 = vld [vmem:[%s665 + $0x30] sm:$0xff]
        %v673 = vld [vmem:[%s665 + $0x38] sm:$0xff]
        %v674 = vld [vmem:[%s665 + $0x40] sm:$0xff]
        %v675 = vld [vmem:[%s665 + $0x48] sm:$0xff]
        %v676 = vld [vmem:[%s665 + $0x50] sm:$0xff]
        %v677 = vld [vmem:[%s665 + $0x58] sm:$0xff]
        %s678 = scalar_lea.vmem [#allocation6], 8
        %v679 = vld [vmem:[%s678] sm:$0xf]
        %v681 = vsel %vm292, %v666, 0
        %v684 = vsel %vm292, %v667, 0
        %v687 = vsel %vm292, %v668, 0
        %v690 = vsel %vm292, %v669, 0
        %v693 = vsel %vm292, %v670, 0
        %v696 = vsel %vm292, %v671, 0
        %v699 = vsel %vm292, %v672, 0
        %v702 = vsel %vm292, %v673, 0
        %v705 = vsel %vm292, %v674, 0
        %v708 = vsel %vm292, %v675, 0
        %v711 = vsel %vm292, %v676, 0
        %v714 = vsel %vm292, %v677, 0
        %v717 = vsel %vm329, %v679, 0
        %719 = vmatprep.subr.mxu0 0.0
        %720 = vmatpush1.msra.mxu0 0.0
        %721 = vmatprep.subr.mxu0 0.0
        %722 = vmatpush1.msra.mxu0 0.0
        %723 = vmatprep.subr.mxu0 0.0
        %724 = vmatpush1.msra.mxu0 0.0
        %725 = vmatprep.subr.mxu0 0.0
        %726 = vmatpush1.msra.mxu0 0.0
        %727 = vmatprep.subr.mxu0 0.0
        %728 = vmatpush1.msra.mxu0 0.0
        %729 = vmatprep.subr.mxu0 0.0
        %730 = vmatpush1.msra.mxu0 0.0
        %731 = vmatprep.subr.mxu0 0.0
        %732 = vmatpush1.msra.mxu0 0.0
        %733 = vmatprep.subr.mxu0 0.0
        %734 = vmatpush1.msra.mxu0 0.0
        %735 = vmatprep.subr.mxu0 0.0
        %736 = vmatpush1.msra.mxu0 0.0
        %737 = vmatprep.subr.mxu0 0.0
        %738 = vmatpush1.msra.mxu0 0.0
        %739 = vmatprep.subr.mxu0 0.0
        %740 = vmatpush1.msra.mxu0 0.0
        %741 = vmatprep.subr.mxu0 0.0
        %742 = vmatpush1.msra.mxu0 0.0
        %743 = vmatprep.subr.mxu0 0.0
        %744 = vmatpush1.msra.mxu0 0.0
        %745 = vmatprep.subr.mxu0 0.0
        %746 = vmatpush1.msra.mxu0 0.0
        %747 = vmatprep.subr.mxu0 0.0
        %748 = vmatpush1.msra.mxu0 0.0
        %749 = vmatprep.subr.mxu0 0.0
        %750 = vmatpush1.msra.mxu0 %v717
        %751 = vmatprep.subr.mxu0 0.0
        %752 = vmatpush2.msra.mxu0 0.0
        %753 = vmatprep.subr.mxu0 0.0
        %754 = vmatpush2.msra.mxu0 0.0
        %755 = vmatprep.subr.mxu0 0.0
        %756 = vmatpush2.msra.mxu0 0.0
        %757 = vmatprep.subr.mxu0 0.0
        %758 = vmatpush2.msra.mxu0 0.0
        %759 = vmatprep.subr.mxu0 0.0
        %760 = vmatpush2.msra.mxu0 0.0
        %761 = vmatprep.subr.mxu0 0.0
        %762 = vmatpush2.msra.mxu0 0.0
        %763 = vmatprep.subr.mxu0 0.0
        %764 = vmatpush2.msra.mxu0 0.0
        %765 = vmatprep.subr.mxu0 0.0
        %766 = vmatpush2.msra.mxu0 0.0
        %767 = vmatprep.subr.mxu0 0.0
        %768 = vmatpush2.msra.mxu0 0.0
        %769 = vmatprep.subr.mxu0 0.0
        %770 = vmatpush2.msra.mxu0 0.0
        %771 = vmatprep.subr.mxu0 0.0
        %772 = vmatpush2.msra.mxu0 0.0
        %773 = vmatprep.subr.mxu0 0.0
        %774 = vmatpush2.msra.mxu0 0.0
        %775 = vmatprep.subr.mxu0 0.0
        %776 = vmatpush2.msra.mxu0 0.0
        %777 = vmatprep.subr.mxu0 0.0
        %778 = vmatpush2.msra.mxu0 0.0
        %779 = vmatprep.subr.mxu0 0.0
        %780 = vmatpush2.msra.mxu0 0.0
        %781 = vmatprep.subr.mxu0 0.0
        %782 = vmatpush2.msra.mxu0 0.0
        %783 = vmatprep.mubr.f32.mxu0 0.0
        %784 = vmatmul.mubr.f32.gmra.mxu0 %v681
        %v785 = vpop.f32.mrf.mxu0
        %v786 = vadd.f32 0.0, %v785
        %v787 = vpop.f32.mrf.mxu0
        %788 = vmatprep.mubr.f32.mxu0 0.0
        %789 = vmatmul.mubr.f32.gmra.mxu0 %v684
        %v790 = vpop.f32.mrf.mxu0
        %v791 = vadd.f32 0.0, %v790
        %v792 = vpop.f32.mrf.mxu0
        %793 = vmatprep.mubr.f32.mxu0 0.0
        %794 = vmatmul.mubr.f32.gmra.mxu0 %v687
        %v795 = vpop.f32.mrf.mxu0
        %v796 = vadd.f32 0.0, %v795
        %v797 = vpop.f32.mrf.mxu0
        %798 = vmatprep.mubr.f32.mxu0 0.0
        %799 = vmatmul.mubr.f32.gmra.mxu0 %v690
        %v800 = vpop.f32.mrf.mxu0
        %v801 = vadd.f32 0.0, %v800
        %v802 = vpop.f32.mrf.mxu0
        %803 = vmatprep.mubr.f32.mxu0 0.0
        %804 = vmatmul.mubr.f32.gmra.mxu0 %v693
        %v805 = vpop.f32.mrf.mxu0
        %v806 = vadd.f32 0.0, %v805
        %v807 = vpop.f32.mrf.mxu0
        %808 = vmatprep.mubr.f32.mxu0 0.0
        %809 = vmatmul.mubr.f32.gmra.mxu0 %v696
        %v810 = vpop.f32.mrf.mxu0
        %v811 = vadd.f32 0.0, %v810
        %v812 = vpop.f32.mrf.mxu0
        %813 = vmatprep.mubr.f32.mxu0 0.0
        %814 = vmatmul.mubr.f32.gmra.mxu0 %v699
        %v815 = vpop.f32.mrf.mxu0
        %v816 = vadd.f32 0.0, %v815
        %v817 = vpop.f32.mrf.mxu0
        %818 = vmatprep.mubr.f32.mxu0 0.0
        %819 = vmatmul.mubr.f32.gmra.mxu0 %v702
        %v820 = vpop.f32.mrf.mxu0
        %v821 = vadd.f32 0.0, %v820
        %v822 = vpop.f32.mrf.mxu0
        %823 = vmatprep.mubr.f32.mxu0 0.0
        %824 = vmatmul.mubr.f32.gmra.mxu0 %v705
        %v825 = vpop.f32.mrf.mxu0
        %v826 = vadd.f32 0.0, %v825
        %v827 = vpop.f32.mrf.mxu0
        %828 = vmatprep.mubr.f32.mxu0 0.0
        %829 = vmatmul.mubr.f32.gmra.mxu0 %v708
        %v830 = vpop.f32.mrf.mxu0
        %v831 = vadd.f32 0.0, %v830
        %v832 = vpop.f32.mrf.mxu0
        %833 = vmatprep.mubr.f32.mxu0 0.0
        %834 = vmatmul.mubr.f32.gmra.mxu0 %v711
        %v835 = vpop.f32.mrf.mxu0
        %v836 = vadd.f32 0.0, %v835
        %v837 = vpop.f32.mrf.mxu0
        %838 = vmatprep.mubr.f32.mxu0 0.0
        %839 = vmatmul.mubr.f32.gmra.mxu0 %v714
        %v840 = vpop.f32.mrf.mxu0
        %v841 = vadd.f32 0.0, %v840
        %v842 = vpop.f32.mrf.mxu0
        %843 = vdwg.mxu0
        %v844 = vadd.f32 %v651, %v786
        %v845 = vadd.f32 %v652, %v791
        %v846 = vadd.f32 %v653, %v796
        %v847 = vadd.f32 %v654, %v801
        %v848 = vadd.f32 %v655, %v806
        %v849 = vadd.f32 %v656, %v811
        %v850 = vadd.f32 %v657, %v816
        %v851 = vadd.f32 %v658, %v821
        %v852 = vadd.f32 %v659, %v826
        %v853 = vadd.f32 %v660, %v831
        %v854 = vadd.f32 %v661, %v836
        %v855 = vadd.f32 %v662, %v841
        %v856 = vxor.u32 %v844, 2147483648
        %v857 = vxor.u32 %v845, 2147483648
        %v858 = vxor.u32 %v846, 2147483648
        %v859 = vxor.u32 %v847, 2147483648
        %v860 = vxor.u32 %v848, 2147483648
        %v861 = vxor.u32 %v849, 2147483648
        %v862 = vxor.u32 %v850, 2147483648
        %v863 = vxor.u32 %v851, 2147483648
        %v864 = vxor.u32 %v852, 2147483648
        %v865 = vxor.u32 %v853, 2147483648
        %v866 = vxor.u32 %v854, 2147483648
        %v867 = vxor.u32 %v855, 2147483648
        %v868 = vmul.f32 %v856, 1.442695
        %v869 = vpow.pop %v868
        %v870 = vmul.f32 %v857, 1.442695
        %v871 = vpow.pop %v870
        %v872 = vmul.f32 %v858, 1.442695
        %v873 = vpow.pop %v872
        %v874 = vmul.f32 %v859, 1.442695
        %v875 = vpow.pop %v874
        %v876 = vmul.f32 %v860, 1.442695
        %v877 = vpow.pop %v876
        %v878 = vmul.f32 %v861, 1.442695
        %v879 = vpow.pop %v878
        %v880 = vmul.f32 %v862, 1.442695
        %v881 = vpow.pop %v880
        %v882 = vmul.f32 %v863, 1.442695
        %v883 = vpow.pop %v882
        %v884 = vmul.f32 %v864, 1.442695
        %v885 = vpow.pop %v884
        %v886 = vmul.f32 %v865, 1.442695
        %v887 = vpow.pop %v886
        %v888 = vmul.f32 %v866, 1.442695
        %v889 = vpow.pop %v888
        %v890 = vmul.f32 %v867, 1.442695
        %v891 = vpow.pop %v890
        %v892 = vadd.f32 %v869, 1.0
        %v893 = vadd.f32 %v871, 1.0
        %v894 = vadd.f32 %v873, 1.0
        %v895 = vadd.f32 %v875, 1.0
        %v896 = vadd.f32 %v877, 1.0
        %v897 = vadd.f32 %v879, 1.0
        %v898 = vadd.f32 %v881, 1.0
        %v899 = vadd.f32 %v883, 1.0
        %v900 = vadd.f32 %v885, 1.0
        %v901 = vadd.f32 %v887, 1.0
        %v902 = vadd.f32 %v889, 1.0
        %v903 = vadd.f32 %v891, 1.0
        %v904 = vrcp.pop %v892
        %v905 = vmul.f32 1.0, %v904
        %v906 = vrcp.pop %v893
        %v907 = vmul.f32 1.0, %v906
        %v908 = vrcp.pop %v894
        %v909 = vmul.f32 1.0, %v908
        %v910 = vrcp.pop %v895
        %v911 = vmul.f32 1.0, %v910
        %v912 = vrcp.pop %v896
        %v913 = vmul.f32 1.0, %v912
        %v914 = vrcp.pop %v897
        %v915 = vmul.f32 1.0, %v914
        %v916 = vrcp.pop %v898
        %v917 = vmul.f32 1.0, %v916
        %v918 = vrcp.pop %v899
        %v919 = vmul.f32 1.0, %v918
        %v920 = vrcp.pop %v900
        %v921 = vmul.f32 1.0, %v920
        %v922 = vrcp.pop %v901
        %v923 = vmul.f32 1.0, %v922
        %v924 = vrcp.pop %v902
        %v925 = vmul.f32 1.0, %v924
        %v926 = vrcp.pop %v903
        %v927 = vmul.f32 1.0, %v926
        %940 = vrot.lane.b32.xlu0 %v905, 120
        %v941 = vpop.permute.xlu0 %940
        %942 = vrot.lane.b32.xlu0 %v907, 120
        %v943 = vpop.permute.xlu0 %942
        %944 = vrot.lane.b32.xlu0 %v909, 120
        %v945 = vpop.permute.xlu0 %944
        %946 = vrot.lane.b32.xlu0 %v911, 120
        %v947 = vpop.permute.xlu0 %946
        %948 = vrot.lane.b32.xlu0 %v913, 120
        %v949 = vpop.permute.xlu0 %948
        %950 = vrot.lane.b32.xlu0 %v915, 120
        %v951 = vpop.permute.xlu0 %950
        %952 = vrot.lane.b32.xlu0 %v917, 120
        %v953 = vpop.permute.xlu0 %952
        %954 = vrot.lane.b32.xlu0 %v919, 120
        %v955 = vpop.permute.xlu0 %954
        %956 = vrot.lane.b32.xlu0 %v921, 120
        %v957 = vpop.permute.xlu0 %956
        %958 = vrot.lane.b32.xlu0 %v923, 120
        %v959 = vpop.permute.xlu0 %958
        %960 = vrot.lane.b32.xlu0 %v925, 120
        %v961 = vpop.permute.xlu0 %960
        %962 = vrot.lane.b32.xlu0 %v927, 120
        %v963 = vpop.permute.xlu0 %962
        %v976 = vmul.f32 %v844, %v941
        %v977 = vmul.f32 %v845, %v943
        %v978 = vmul.f32 %v846, %v945
        %v979 = vmul.f32 %v847, %v947
        %v980 = vmul.f32 %v848, %v949
        %v981 = vmul.f32 %v849, %v951
        %v982 = vmul.f32 %v850, %v953
        %v983 = vmul.f32 %v851, %v955
        %v984 = vmul.f32 %v852, %v957
        %v985 = vmul.f32 %v853, %v959
        %v986 = vmul.f32 %v854, %v961
        %v987 = vmul.f32 %v855, %v963
        %988 = vxpose.xlu0.b32.start [1/16] %v976, 128
        %989 = vxpose.xlu0.b32.cont [2/16] %v977, 128
        %990 = vxpose.xlu0.b32.cont [3/16] %v978, 128
        %991 = vxpose.xlu0.b32.cont [4/16] %v979, 128
        %992 = vxpose.xlu0.b32.cont [5/16] %v980, 128
        %993 = vxpose.xlu0.b32.cont [6/16] %v981, 128
        %994 = vxpose.xlu0.b32.cont [7/16] %v982, 128
        %995 = vxpose.xlu0.b32.cont [8/16] %v983, 128
        %996 = vxpose.xlu0.b32.cont [9/16] %v984, 128
        %997 = vxpose.xlu0.b32.cont [10/16] %v985, 128
        %998 = vxpose.xlu0.b32.cont [11/16] %v986, 128
        %999 = vxpose.xlu0.b32.cont [12/16] %v987, 128
        %1000 = vxpose.xlu0.b32.cont [13/16] 0.0, 128
        %1001 = vxpose.xlu0.b32.cont [14/16] 0.0, 128
        %1002 = vxpose.xlu0.b32.cont [15/16] 0.0, 128
        %1003 = vxpose.xlu0.b32.end [16/16] 0.0, 128
        %v1004 = vpop.trf.xlu0
        %v1005 = vpop.trf.xlu0
        %v1006 = vpop.trf.xlu0
        %v1007 = vpop.trf.xlu0
        %v1008 = vpop.trf.xlu0
        %v1009 = vpop.trf.xlu0
        %v1010 = vpop.trf.xlu0
        %v1011 = vpop.trf.xlu0
        %v1012 = vpop.trf.xlu0
        %v1013 = vpop.trf.xlu0
        %v1014 = vpop.trf.xlu0
        %v1015 = vpop.trf.xlu0
        %v1016 = vpop.trf.xlu0
        %v1017 = vpop.trf.xlu0
        %v1018 = vpop.trf.xlu0
        %v1019 = vpop.trf.xlu0
        %vm1020 = vcmask 785408
        %1021 = vst.msk [vmem:[%s214] sm:$0xff] %vm1020, %v1004
        %s1022 = sand.u32 %s111, 1
        %s1023 = scalar_lea.sflag [#allocation5], %s1022
        %s1024 = sand.u32 %s111, 1
        %s1025 = smul.addr %s1024, 8
        %s1026 = scalar_lea.vmem [#allocation8], %s1025
        // Predicated region
        $region45: #{tpu_custom_call.1} parent=31 // pred_check
          %p1027 = pneg %p121
        $region46: #{tpu_custom_call.1} parent=31 // pred_check_branch
          %1029 = sbr.rel (%p1027) target = $region48
        $region47: #{tpu_custom_call.1} parent=31 // pred_region
          %s1031 = ssub.s32 128, 128
          %1032 = vsyncadd %s1023, %s1031
          %s1033 = sadd.s32 %s26, %s25
          %s1034 = smul.addr %s1033, 128
          %s1035 = scalar_lea.hbm %s3, %s1034
          %s1037 = sshll.u32 %s1026, 4
          %s1038 = int_to_ptr.vmem [resolvable:$true] %s1037
          %1040 = dma.vmem_to_hbm [thread:$0]  %s1038, 128, %s1035, %s1023
        $region48: #{tpu_custom_call.1} parent=31 // pred_fallthru
          _
      $region32: #{tpu_custom_call.1} parent=5 // pred_fallthru
        _
      %p1041 = scmp.le.s32.totalorder 2, %s16
      // Predicated region
      $region49: #{tpu_custom_call.1} parent=5 // pred_check
        %p1042 = pneg %p1041
      $region50: #{tpu_custom_call.1} parent=5 // pred_check_branch
        %1044 = sbr.rel (%p1042) target = $region52
      $region51: #{tpu_custom_call.1} parent=5 // pred_region
        %s1045 = ssub.s32 %s16, 2
        // Predicated region
        $region53: #{tpu_custom_call.1} parent=51 // pred_check
          %p1046 = pneg %p127
        $region54: #{tpu_custom_call.1} parent=51 // pred_check_branch
          %1048 = sbr.rel (%p1046) target = $region56
        $region55: #{tpu_custom_call.1} parent=51 // pred_region
          %s1049 = sand.u32 %s112, 1
          %s1050 = scalar_lea.sflag [#allocation5], %s1049
          %s1051 = sand.u32 %s112, 1
          %s1052 = smul.addr %s1051, 8
          %s1053 = scalar_lea.vmem [#allocation8], %s1052
          %1054 = dma.done %s1050, 128
        $region56: #{tpu_custom_call.1} parent=51 // pred_fallthru
          _
      $region52: #{tpu_custom_call.1} parent=5 // pred_fallthru
        _
    $region6: #{tpu_custom_call.1} parent=1 // loop_footer
      %s20 = sadd.s32 1, %s16
    $region7: #{tpu_custom_call.1} parent=1 // loop_footer_branch
      %15 = sbr.rel target = $region3
    $region8: #{tpu_custom_call.1} parent=1 // loop_exit
      _
    %1055 = vsyncpa [#allocation4], 1
    %s1056 = scalar_lea.sflag [#allocation4], 1
    %1057 = vsyncpa %s1056, 1
    %1058 = vsyncpa [#allocation7], 1
    %1059 = vsyncpa [#allocation5], 1
    %s1060 = scalar_lea.sflag [#allocation5], 1
    %1061 = vsyncpa %s1060, 1

</llo_original>
